<compile_context>
chip_gen: v6e
topology: v6e:2x2x1
jax: 0.10.0
libtpu: 0.0.40
codegen_flags: <defaults>
</compile_context>

<pallas_src>
import jax
import jax.numpy as jnp
from jax import lax
from jax.experimental import pallas as pl
from jax.experimental.pallas import tpu as pltpu


def _round_up(v, m):
    return (v + m - 1) // m * m


def final_layer_kernel(x_ref, c_ref, ws_ref, bs_ref, wc_ref, bc_ref,
                       wl_ref, bl_ref, o_ref):
    w_dtype = ws_ref.dtype

    # --- adaLN modulation: SiLU(c) in f32 (EUP), then two (H,H) MXU matmuls.
    c = c_ref[...].astype(jnp.float32)
    c_silu = (c * jax.nn.sigmoid(c)).astype(w_dtype)
    shift = jnp.dot(c_silu, ws_ref[...],
                    preferred_element_type=jnp.float32) + bs_ref[...]   # (T,H) f32
    # b_scale already contains modulate()'s "+1".
    scale = jnp.dot(c_silu, wc_ref[...],
                    preferred_element_type=jnp.float32) + bc_ref[...]   # (T,H) f32

    # --- LayerNorm(x): no affine, eps=1e-4, biased variance, f32 stats ------
    x = x_ref[...].astype(jnp.float32)
    mean = jnp.mean(x, axis=-1, keepdims=True)
    xc = x - mean
    var = jnp.mean(xc * xc, axis=-1, keepdims=True)
    xn = xc * lax.rsqrt(var + 1e-4)

    # --- modulate (f32 epilogue, +1 pre-folded), then output projection -----
    y = (xn * scale + shift).astype(wl_ref.dtype)
    out = jnp.dot(y, wl_ref[...],
                  preferred_element_type=jnp.float32) + bl_ref[...]     # (T,OUT_PAD)
    o_ref[...] = out.astype(o_ref.dtype)


def prepare_final_layer_params(w_ada, b_ada, w_lin, b_lin, *, param_dtype=None):
    """One-time parameter prep (do at init, NOT per step): split the adaLN
    projection, transpose weights to (in, out), cast to param_dtype, pad the
    output head to a 128-lane multiple, fold modulate's +1 into the scale
    bias, keep biases in f32."""
    H = w_ada.shape[1]
    out_size = w_lin.shape[0]
    out_pad = _round_up(out_size, 128)           # lane-dense output stores
    if param_dtype is None:
        param_dtype = w_ada.dtype

    # torch chunk(2, dim=1): rows [:H] of w_ada -> shift, rows [H:] -> scale
    w_shift_t = jnp.asarray(w_ada[:H].T, dtype=param_dtype)          # (H, H)
    w_scale_t = jnp.asarray(w_ada[H:].T, dtype=param_dtype)          # (H, H)
    b_shift = jnp.asarray(b_ada[:H], dtype=jnp.float32).reshape(1, H)
    # modulate() multiplies by (1 + scale); fold the +1 into the bias once.
    b_scale1 = jnp.asarray(b_ada[H:], dtype=jnp.float32).reshape(1, H) + 1.0

    w_lin_t = jnp.zeros((H, out_pad), dtype=param_dtype)
    w_lin_t = w_lin_t.at[:, :out_size].set(jnp.asarray(w_lin.T, dtype=param_dtype))
    b_lin_p = jnp.zeros((1, out_pad), dtype=jnp.float32)
    b_lin_p = b_lin_p.at[0, :out_size].set(jnp.asarray(b_lin, dtype=jnp.float32))

    return dict(w_shift_t=w_shift_t, b_shift=b_shift,
                w_scale_t=w_scale_t, b_scale1=b_scale1,
                w_lin_t=w_lin_t, b_lin=b_lin_p, out_size=out_size)


def _choose_tile_n(n, tile_max, *, min_steps=2):
    """16-aligned row tile such that the tail tile is nearly full and the grid
    has >= min_steps steps (both v7x TensorCores get work)."""
    n16 = _round_up(max(n, 16), 16)
    steps = max(min_steps, pl.cdiv(n16, tile_max))
    tile = _round_up(pl.cdiv(n16, steps), 16)
    return min(tile, _round_up(tile_max, 16))


def final_layer(x, c, params, *, tile_n=None, tile_n_max=512, unpad=True,
                vmem_limit_bytes=None):
    """x, c: (N, H). params: from prepare_final_layer_params.
    Returns (N, out_size), or the padded lane-dense (n_pad, out_pad) buffer if
    unpad=False (avoids an extra HBM copy when the consumer can handle it)."""
    N, H = x.shape
    out_size = params["out_size"]
    out_pad = params["w_lin_t"].shape[1]

    # Row tiling: 16-aligned (packed bf16 sublanes), near-full tail, >=2 steps.
    if tile_n is None:
        tile_n = _choose_tile_n(N, tile_n_max)
    else:
        tile_n = max(16, _round_up(tile_n, 16))
        tile_n = min(tile_n, _round_up(N, 16))
    n_pad = _round_up(N, tile_n)
    if n_pad != N:
        x = jnp.pad(x, ((0, n_pad - N), (0, 0)))
        c = jnp.pad(c, ((0, n_pad - N), (0, 0)))
    grid = (n_pad // tile_n,)

    row_spec = pl.BlockSpec((tile_n, H), lambda i: (i, 0))

    def const(shape):
        # Constant index_map -> block never changes; single-buffer it so the
        # pipeline does not allocate a useless second copy of the weights.
        return pl.BlockSpec(shape, lambda i: (0, 0),
                            pipeline_mode=pl.Buffered(1))

    if vmem_limit_bytes is None:
        p_item = params["w_lin_t"].dtype.itemsize
        x_item = x.dtype.itemsize
        weights = (2 * H * H + H * out_pad) * p_item            # single-buffered
        biases = (2 * H + out_pad) * 4
        io = 2 * (2 * tile_n * H * x_item + tile_n * out_pad * x_item)  # x,c,out dbl-buf
        temps = 8 * tile_n * max(H, out_pad) * 4                # live f32 temps headroom
        vmem_limit_bytes = int(min(max(2 * (weights + biases + io + temps),
                                       32 * 1024 * 1024),
                                   60 * 1024 * 1024))           # < v7x 64 MiB physical

    def nbytes(a):
        return a.size * a.dtype.itemsize

    cost = pl.CostEstimate(
        flops=4 * n_pad * H * H + 2 * n_pad * H * out_pad,
        transcendentals=n_pad * H,
        bytes_accessed=(nbytes(x) + nbytes(c)
                        + nbytes(params["w_shift_t"]) + nbytes(params["w_scale_t"])
                        + nbytes(params["w_lin_t"])
                        + nbytes(params["b_shift"]) + nbytes(params["b_scale1"])
                        + nbytes(params["b_lin"])
                        + n_pad * out_pad * x.dtype.itemsize))

    out = pl.pallas_call(
        final_layer_kernel,
        out_shape=jax.ShapeDtypeStruct((n_pad, out_pad), x.dtype),
        grid=grid,
        in_specs=[
            row_spec,                    # x tile
            row_spec,                    # c tile
            const((H, H)),               # w_shift_t (VMEM-resident, 1 buffer)
            const((1, H)),               # b_shift
            const((H, H)),               # w_scale_t
            const((1, H)),               # b_scale (+1 folded in)
            const((H, out_pad)),         # w_lin_t (lane-padded)
            const((1, out_pad)),         # b_lin
        ],
        out_specs=pl.BlockSpec((tile_n, out_pad), lambda i: (i, 0)),
        compiler_params=pltpu.CompilerParams(
            dimension_semantics=("parallel",),      # shard row tiles across TCs
            vmem_limit_bytes=vmem_limit_bytes),
        cost_estimate=cost,
    )(x, c,
      params["w_shift_t"], params["b_shift"],
      params["w_scale_t"], params["b_scale1"],
      params["w_lin_t"], params["b_lin"])

    if unpad:
        out = out[:N, :out_size]
    return out


def final_layer_ref(x, c, w_ada, b_ada, w_lin, b_lin):
    """Pure-JAX reference mirroring the PyTorch module."""
    H = x.shape[-1]
    ada = jax.nn.silu(c) @ w_ada.T + b_ada
    shift, scale = ada[:, :H], ada[:, H:]
    mean = jnp.mean(x, axis=-1, keepdims=True)
    var = jnp.mean((x - mean) ** 2, axis=-1, keepdims=True)
    xn = (x - mean) / jnp.sqrt(var + 1e-4)
    y = xn * (1 + scale) + shift
    return y @ w_lin.T + b_lin


if __name__ == "__main__":
    hidden, out_size = 32, 16
    N = 40                       # not a multiple of tile_n -> exercises tail padding

    key = jax.random.PRNGKey(0)
    kx, kc, kwa, kba, kwl, kbl = jax.random.split(key, 6)
    x = jax.random.normal(kx, (N, hidden), dtype=jnp.float32)
    c = jax.random.normal(kc, (N, hidden), dtype=jnp.float32)
    # nn.Linear layout: weight (out_features, in_features)
    w_ada = jax.random.normal(kwa, (2 * hidden, hidden), dtype=jnp.float32) * 0.05
    b_ada = jax.random.normal(kba, (2 * hidden,), dtype=jnp.float32) * 0.05
    w_lin = jax.random.normal(kwl, (out_size, hidden), dtype=jnp.float32) * 0.05
    b_lin = jax.random.normal(kbl, (out_size,), dtype=jnp.float32) * 0.05

    ref = final_layer_ref(x, c, w_ada, b_ada, w_lin, b_lin)
    params = prepare_final_layer_params(w_ada, b_ada, w_lin, b_lin)

    # f32 path, explicit small tile -> 3-step grid (tests pipelining + tail pad).
    out = jax.block_until_ready(final_layer(x, c, params, tile_n=16))
    assert out.shape == (N, out_size)
    assert jnp.allclose(out, ref, atol=1e-4, rtol=1e-4), "f32 mismatch vs reference"

    # f32 path, automatic tile selection (>=2 grid steps, near-full tail).
    out_auto = jax.block_until_ready(final_layer(x, c, params))
    assert out_auto.shape == (N, out_size)
    assert jnp.allclose(out_auto, ref, atol=1e-4, rtol=1e-4), "auto-tile mismatch"

    # bf16 path: bf16 MXU operands, f32 SiLU/LayerNorm/accumulation in-kernel.
    params_bf16 = prepare_final_layer_params(w_ada, b_ada, w_lin, b_lin,
                                             param_dtype=jnp.bfloat16)
    out_bf16 = jax.block_until_ready(
        final_layer(x.astype(jnp.bfloat16), c.astype(jnp.bfloat16),
                    params_bf16, tile_n=16))
    assert out_bf16.shape == (N, out_size)
    assert jnp.allclose(out_bf16.astype(jnp.float32), ref, atol=0.1, rtol=0.1), \
        "bf16 mismatch vs reference"

    print("KERNEL_OK")
</pallas_src>

<mosaic_0001>
module attributes {stable_mosaic.version = 11 : i64} {
  func.func @final_layer_kernel(%arg0: i32, %arg1: memref<16x32xf32, #tpu.memory_space<vmem>>, %arg2: memref<16x32xf32, #tpu.memory_space<vmem>>, %arg3: memref<32x32xf32, #tpu.memory_space<vmem>>, %arg4: memref<1x32xf32, #tpu.memory_space<vmem>>, %arg5: memref<32x32xf32, #tpu.memory_space<vmem>>, %arg6: memref<1x32xf32, #tpu.memory_space<vmem>>, %arg7: memref<32x128xf32, #tpu.memory_space<vmem>>, %arg8: memref<1x128xf32, #tpu.memory_space<vmem>>, %arg9: memref<16x128xf32, #tpu.memory_space<vmem>>) attributes {dimension_semantics = [#tpu.dimension_semantics<parallel>], iteration_bounds = array<i64: 3>, scalar_prefetch = 0 : i64, scratch_operands = 0 : i64, tpu.core_type = #tpu.core_type<tc>, window_params = [{transform_indices = @transform_0, window_bounds = array<i64: 16, 32>}, {transform_indices = @transform_1, window_bounds = array<i64: 16, 32>}, {pipeline_mode = #tpu.pipeline_mode<synchronous>, transform_indices = @transform_2, window_bounds = array<i64: 32, 32>}, {pipeline_mode = #tpu.pipeline_mode<synchronous>, transform_indices = @transform_3, window_bounds = array<i64: 1, 32>}, {pipeline_mode = #tpu.pipeline_mode<synchronous>, transform_indices = @transform_4, window_bounds = array<i64: 32, 32>}, {pipeline_mode = #tpu.pipeline_mode<synchronous>, transform_indices = @transform_5, window_bounds = array<i64: 1, 32>}, {pipeline_mode = #tpu.pipeline_mode<synchronous>, transform_indices = @transform_6, window_bounds = array<i64: 32, 128>}, {pipeline_mode = #tpu.pipeline_mode<synchronous>, transform_indices = @transform_7, window_bounds = array<i64: 1, 128>}, {transform_indices = @transform_8, window_bounds = array<i64: 16, 128>}]} {
    %c0 = arith.constant 0 : index
    %c0_0 = arith.constant 0 : index
    %0 = vector.load %arg2[%c0, %c0_0] : memref<16x32xf32, #tpu.memory_space<vmem>>, vector<16x32xf32>
    %1 = arith.negf %0 : vector<16x32xf32>
    %2 = math.exp %1 : vector<16x32xf32>
    %cst = arith.constant 1.000000e+00 : f32
    %3 = vector.broadcast %cst : f32 to vector<16x32xf32>
    %4 = arith.addf %3, %2 : vector<16x32xf32>
    %5 = arith.divf %3, %4 : vector<16x32xf32>
    %6 = arith.mulf %0, %5 : vector<16x32xf32>
    %c0_1 = arith.constant 0 : index
    %c0_2 = arith.constant 0 : index
    %7 = vector.load %arg3[%c0_1, %c0_2] : memref<32x32xf32, #tpu.memory_space<vmem>>, vector<32x32xf32>
    %cst_3 = arith.constant dense<0.000000e+00> : vector<16x32xf32>
    %8 = tpu.matmul %6, %7, %cst_3 {dimension_numbers = #tpu.dot_dimension_numbers<[1], [0], [0], [1], [0, 0, 1, 1], [], []>} : vector<16x32xf32>, vector<32x32xf32>, vector<16x32xf32> -> vector<16x32xf32>
    %c0_4 = arith.constant 0 : index
    %c0_5 = arith.constant 0 : index
    %9 = vector.load %arg4[%c0_4, %c0_5] : memref<1x32xf32, #tpu.memory_space<vmem>>, vector<1x32xf32>
    %10 = vector.broadcast %9 : vector<1x32xf32> to vector<16x32xf32>
    %11 = arith.addf %8, %10 : vector<16x32xf32>
    %c0_6 = arith.constant 0 : index
    %c0_7 = arith.constant 0 : index
    %12 = vector.load %arg5[%c0_6, %c0_7] : memref<32x32xf32, #tpu.memory_space<vmem>>, vector<32x32xf32>
    %cst_8 = arith.constant dense<0.000000e+00> : vector<16x32xf32>
    %13 = tpu.matmul %6, %12, %cst_8 {dimension_numbers = #tpu.dot_dimension_numbers<[1], [0], [0], [1], [0, 0, 1, 1], [], []>} : vector<16x32xf32>, vector<32x32xf32>, vector<16x32xf32> -> vector<16x32xf32>
    %c0_9 = arith.constant 0 : index
    %c0_10 = arith.constant 0 : index
    %14 = vector.load %arg6[%c0_9, %c0_10] : memref<1x32xf32, #tpu.memory_space<vmem>>, vector<1x32xf32>
    %15 = vector.broadcast %14 : vector<1x32xf32> to vector<16x32xf32>
    %16 = arith.addf %13, %15 : vector<16x32xf32>
    %c0_11 = arith.constant 0 : index
    %c0_12 = arith.constant 0 : index
    %17 = vector.load %arg1[%c0_11, %c0_12] : memref<16x32xf32, #tpu.memory_space<vmem>>, vector<16x32xf32>
    %cst_13 = arith.constant dense<0.000000e+00> : vector<16xf32>
    %18 = vector.multi_reduction <add>, %17, %cst_13 [1] : vector<16x32xf32> to vector<16xf32>
    %19 = vector.shape_cast %18 : vector<16xf32> to vector<16x1xf32>
    %cst_14 = arith.constant 3.200000e+01 : f32
    %20 = vector.broadcast %cst_14 : f32 to vector<16x1xf32>
    %21 = arith.divf %19, %20 : vector<16x1xf32>
    %22 = vector.broadcast %21 : vector<16x1xf32> to vector<16x32xf32>
    %23 = arith.subf %17, %22 : vector<16x32xf32>
    %24 = arith.mulf %23, %23 : vector<16x32xf32>
    %cst_15 = arith.constant dense<0.000000e+00> : vector<16xf32>
    %25 = vector.multi_reduction <add>, %24, %cst_15 [1] : vector<16x32xf32> to vector<16xf32>
    %26 = vector.shape_cast %25 : vector<16xf32> to vector<16x1xf32>
    %cst_16 = arith.constant 3.200000e+01 : f32
    %27 = vector.broadcast %cst_16 : f32 to vector<16x1xf32>
    %28 = arith.divf %26, %27 : vector<16x1xf32>
    %cst_17 = arith.constant 9.99999974E-5 : f32
    %29 = vector.broadcast %cst_17 : f32 to vector<16x1xf32>
    %30 = arith.addf %28, %29 : vector<16x1xf32>
    %31 = math.rsqrt %30 : vector<16x1xf32>
    %32 = vector.broadcast %31 : vector<16x1xf32> to vector<16x32xf32>
    %33 = arith.mulf %23, %32 : vector<16x32xf32>
    %34 = arith.mulf %33, %16 : vector<16x32xf32>
    %35 = arith.addf %34, %11 : vector<16x32xf32>
    %c0_18 = arith.constant 0 : index
    %c0_19 = arith.constant 0 : index
    %36 = vector.load %arg7[%c0_18, %c0_19] : memref<32x128xf32, #tpu.memory_space<vmem>>, vector<32x128xf32>
    %cst_20 = arith.constant dense<0.000000e+00> : vector<16x128xf32>
    %37 = tpu.matmul %35, %36, %cst_20 {dimension_numbers = #tpu.dot_dimension_numbers<[1], [0], [0], [1], [0, 0, 1, 1], [], []>} : vector<16x32xf32>, vector<32x128xf32>, vector<16x128xf32> -> vector<16x128xf32>
    %c0_21 = arith.constant 0 : index
    %c0_22 = arith.constant 0 : index
    %38 = vector.load %arg8[%c0_21, %c0_22] : memref<1x128xf32, #tpu.memory_space<vmem>>, vector<1x128xf32>
    %39 = vector.broadcast %38 : vector<1x128xf32> to vector<16x128xf32>
    %40 = arith.addf %37, %39 : vector<16x128xf32>
    %c0_23 = arith.constant 0 : index
    %c0_24 = arith.constant 0 : index
    %41 = vector.load %arg9[%c0_23, %c0_24] : memref<16x128xf32, #tpu.memory_space<vmem>>, vector<16x128xf32>
    tpu.vector_store %arg9[%c0_23, %c0_24], %40 {strides = array<i32>} : memref<16x128xf32, #tpu.memory_space<vmem>>, vector<16x128xf32>,
    return
  }
  func.func @transform_0(%arg0: i32) -> (i32, i32) {
    %c0_i32 = arith.constant 0 : i32
    %c0_i32_0 = arith.constant 0 : i32
    return %arg0, %c0_i32 : i32, i32
  }
  func.func @transform_1(%arg0: i32) -> (i32, i32) {
    %c0_i32 = arith.constant 0 : i32
    %c0_i32_0 = arith.constant 0 : i32
    return %arg0, %c0_i32 : i32, i32
  }
  func.func @transform_2(%arg0: i32) -> (i32, i32) {
    %c0_i32 = arith.constant 0 : i32
    %c0_i32_0 = arith.constant 0 : i32
    %c0_i32_1 = arith.constant 0 : i32
    return %c0_i32, %c0_i32_0 : i32, i32
  }
  func.func @transform_3(%arg0: i32) -> (i32, i32) {
    %c0_i32 = arith.constant 0 : i32
    %c0_i32_0 = arith.constant 0 : i32
    %c0_i32_1 = arith.constant 0 : i32
    return %c0_i32, %c0_i32_0 : i32, i32
  }
  func.func @transform_4(%arg0: i32) -> (i32, i32) {
    %c0_i32 = arith.constant 0 : i32
    %c0_i32_0 = arith.constant 0 : i32
    %c0_i32_1 = arith.constant 0 : i32
    return %c0_i32, %c0_i32_0 : i32, i32
  }
  func.func @transform_5(%arg0: i32) -> (i32, i32) {
    %c0_i32 = arith.constant 0 : i32
    %c0_i32_0 = arith.constant 0 : i32
    %c0_i32_1 = arith.constant 0 : i32
    return %c0_i32, %c0_i32_0 : i32, i32
  }
  func.func @transform_6(%arg0: i32) -> (i32, i32) {
    %c0_i32 = arith.constant 0 : i32
    %c0_i32_0 = arith.constant 0 : i32
    %c0_i32_1 = arith.constant 0 : i32
    return %c0_i32, %c0_i32_0 : i32, i32
  }
  func.func @transform_7(%arg0: i32) -> (i32, i32) {
    %c0_i32 = arith.constant 0 : i32
    %c0_i32_0 = arith.constant 0 : i32
    %c0_i32_1 = arith.constant 0 : i32
    return %c0_i32, %c0_i32_0 : i32, i32
  }
  func.func @transform_8(%arg0: i32) -> (i32, i32) {
    %c0_i32 = arith.constant 0 : i32
    %c0_i32_0 = arith.constant 0 : i32
    return %arg0, %c0_i32 : i32, i32
  }
}

</mosaic_0001>

<llo_original>
// kernel: tpu_custom_call.1
$region0: #{tpu_custom_call.1}
  #allocation0 [shape = 'u32[]', space=smem, size = 0x4, offset = 0x4, fixed_abs, tag = 'smem constant byte address 0x4 - core index']
  #allocation1 [shape = 'u32[144,128]{1,0:T(1,128)}', space=vmem, size = 0x12000, scoped, tag = 'internal scratch']
  %s0 = inlined_call_operand.vmem [shape: f32[48,32], index: 0, kind: input, shape index: {}]
  %s1 = inlined_call_operand.vmem [shape: f32[48,32], index: 1, kind: input, shape index: {}]
  %s2 = inlined_call_operand.vmem [shape: f32[32,32], index: 2, kind: input, shape index: {}]
  %s3 = inlined_call_operand.vmem [shape: f32[1,32], index: 3, kind: input, shape index: {}]
  %s4 = inlined_call_operand.vmem [shape: f32[32,32], index: 4, kind: input, shape index: {}]
  %s5 = inlined_call_operand.vmem [shape: f32[1,32], index: 5, kind: input, shape index: {}]
  %s6 = inlined_call_operand.vmem [shape: f32[32,128], index: 6, kind: input, shape index: {}]
  %s7 = inlined_call_operand.vmem [shape: f32[1,128], index: 7, kind: input, shape index: {}]
  %s8 = inlined_call_operand.hbm [shape: f32[48,128], index: 8, kind: output, shape index: {}]
  %s9 = sld [smem:[#allocation0]]
  $region65: #{tpu_custom_call.1} parent=0
    _
  %s11 = ssub.s32 1, %s9
  %s12 = scalar_select 0, %s11, %s9
  $region1: #{tpu_custom_call.1} parent=0
    #allocation2 [shape = 'u8[16384]{0}', space=vmem, size = 0x4000, scoped, tag = 'output window, operand 0']
    #allocation3 [shape = 's32[2]{0}', space=sflag, size = 0x8, scoped, tag = 'scoped memory for tpu_custom_call.1']
    %13 = vsyncpa [#allocation3], 0
    %s14 = scalar_lea.sflag [#allocation3], 1
    %15 = vsyncpa %s14, 0
    loop: start=0, step=1, limit=5
    $region2: #{tpu_custom_call.1} parent=1 // loop_pre_header
      _
    $region3: #{tpu_custom_call.1} parent=1 // loop_header
      %s17 = sphi 0, %s21
      %p18 = scmp.ge.s32.totalorder %s17, 5
      %s27 = sphi 0, %s29
      %s30 = sphi 0, %s27
      %s31 = sphi 0, %s30
      %s47 = sphi 0, %s31
      %s53 = sphi 0, %s55
      %s56 = sphi 0, %s53
      %s57 = sphi 0, %s56
      %s73 = sphi 0, %s57
      %s77 = sphi 0, %s77
      %s79 = sphi 0, %s77
      %s80 = sphi 0, %s79
      %s94 = sphi 0, %s80
      %s98 = sphi 0, %s98
      %s100 = sphi 0, %s98
      %s101 = sphi 0, %s100
      %s115 = sphi 0, %s101
      %s119 = sphi 0, %s119
      %s121 = sphi 0, %s119
      %s122 = sphi 0, %s121
      %s136 = sphi 0, %s122
      %s140 = sphi 0, %s140
      %s142 = sphi 0, %s140
      %s143 = sphi 0, %s142
      %s157 = sphi 0, %s143
      %s161 = sphi 0, %s161
      %s163 = sphi 0, %s161
      %s164 = sphi 0, %s163
      %s178 = sphi 0, %s164
      %s182 = sphi 0, %s182
      %s184 = sphi 0, %s182
      %s185 = sphi 0, %s184
      %s199 = sphi 0, %s185
      %s205 = sphi 0, %s207
      %s208 = sphi 0, %s205
      %s209 = sphi 0, %s208
      %s225 = sphi 0, %s209
    $region4: #{tpu_custom_call.1} parent=1 // loop_header_branch
      %20 = sbr.rel (%p18) target = $region8
    $region5: #{tpu_custom_call.1} parent=1 // loop_body
      %s22 = ssub.s32 %s17, 1
      %s23 = ssub.s32 %s17, 2
      %s24 = sadd.s32 %s17, 1
      %s25 = ssub.s32 %s17, %s24
      %p26 = scmp.eq.s32.totalorder %s25, 0
      %s28 = sadd.s32 %s27, 1
      %s29 = scalar_select %p26, %s27, %s28
      %p32 = pneg %p26
      %p33 = scmp.eq.s32.totalorder %s17, 2
      %p34 = por %p32, %p33
      %p35 = scmp.ne.s32.totalorder %s27, %s30
      %p36 = scmp.eq.s32.totalorder %s17, 0
      %p37 = por %p35, %p36
      %p38 = scmp.ne.s32.totalorder %s27, %s30
      %p39 = scmp.eq.s32.totalorder %s22, 2
      %p40 = por %p38, %p39
      %p41 = scmp.ne.s32.totalorder %s30, %s31
      %p42 = scmp.eq.s32.totalorder %s22, 0
      %p43 = por %p41, %p42
      %p44 = scmp.ne.s32.totalorder %s30, %s31
      %p45 = scmp.eq.s32.totalorder %s23, 2
      %p46 = por %p44, %p45
      %p48 = scmp.ne.s32.totalorder %s31, %s47
      %p49 = scmp.eq.s32.totalorder %s23, 0
      %p50 = por %p48, %p49
      %s51 = ssub.s32 %s17, %s24
      %p52 = scmp.eq.s32.totalorder %s51, 0
      %s54 = sadd.s32 %s53, 1
      %s55 = scalar_select %p52, %s53, %s54
      %p58 = pneg %p52
      %p59 = scmp.eq.s32.totalorder %s17, 2
      %p60 = por %p58, %p59
      %p61 = scmp.ne.s32.totalorder %s53, %s56
      %p62 = scmp.eq.s32.totalorder %s17, 0
      %p63 = por %p61, %p62
      %p64 = scmp.ne.s32.totalorder %s53, %s56
      %p65 = scmp.eq.s32.totalorder %s22, 2
      %p66 = por %p64, %p65
      %p67 = scmp.ne.s32.totalorder %s56, %s57
      %p68 = scmp.eq.s32.totalorder %s22, 0
      %p69 = por %p67, %p68
      %p70 = scmp.ne.s32.totalorder %s56, %s57
      %p71 = scmp.eq.s32.totalorder %s23, 2
      %p72 = por %p70, %p71
      %p74 = scmp.ne.s32.totalorder %s57, %s73
      %p75 = scmp.eq.s32.totalorder %s23, 0
      %p76 = por %p74, %p75
      %s78 = sadd.s32 %s77, 1
      %p81 = scmp.eq.s32.totalorder %s17, 2
      %p82 = scmp.ne.s32.totalorder %s77, %s79
      %p83 = scmp.eq.s32.totalorder %s17, 0
      %p84 = por %p82, %p83
      %p85 = scmp.ne.s32.totalorder %s77, %s79
      %p86 = scmp.eq.s32.totalorder %s22, 2
      %p87 = por %p85, %p86
      %p88 = scmp.ne.s32.totalorder %s79, %s80
      %p89 = scmp.eq.s32.totalorder %s22, 0
      %p90 = por %p88, %p89
      %p91 = scmp.ne.s32.totalorder %s79, %s80
      %p92 = scmp.eq.s32.totalorder %s23, 2
      %p93 = por %p91, %p92
      %p95 = scmp.ne.s32.totalorder %s80, %s94
      %p96 = scmp.eq.s32.totalorder %s23, 0
      %p97 = por %p95, %p96
      %s99 = sadd.s32 %s98, 1
      %p102 = scmp.eq.s32.totalorder %s17, 2
      %p103 = scmp.ne.s32.totalorder %s98, %s100
      %p104 = scmp.eq.s32.totalorder %s17, 0
      %p105 = por %p103, %p104
      %p106 = scmp.ne.s32.totalorder %s98, %s100
      %p107 = scmp.eq.s32.totalorder %s22, 2
      %p108 = por %p106, %p107
      %p109 = scmp.ne.s32.totalorder %s100, %s101
      %p110 = scmp.eq.s32.totalorder %s22, 0
      %p111 = por %p109, %p110
      %p112 = scmp.ne.s32.totalorder %s100, %s101
      %p113 = scmp.eq.s32.totalorder %s23, 2
      %p114 = por %p112, %p113
      %p116 = scmp.ne.s32.totalorder %s101, %s115
      %p117 = scmp.eq.s32.totalorder %s23, 0
      %p118 = por %p116, %p117
      %s120 = sadd.s32 %s119, 1
      %p123 = scmp.eq.s32.totalorder %s17, 2
      %p124 = scmp.ne.s32.totalorder %s119, %s121
      %p125 = scmp.eq.s32.totalorder %s17, 0
      %p126 = por %p124, %p125
      %p127 = scmp.ne.s32.totalorder %s119, %s121
      %p128 = scmp.eq.s32.totalorder %s22, 2
      %p129 = por %p127, %p128
      %p130 = scmp.ne.s32.totalorder %s121, %s122
      %p131 = scmp.eq.s32.totalorder %s22, 0
      %p132 = por %p130, %p131
      %p133 = scmp.ne.s32.totalorder %s121, %s122
      %p134 = scmp.eq.s32.totalorder %s23, 2
      %p135 = por %p133, %p134
      %p137 = scmp.ne.s32.totalorder %s122, %s136
      %p138 = scmp.eq.s32.totalorder %s23, 0
      %p139 = por %p137, %p138
      %s141 = sadd.s32 %s140, 1
      %p144 = scmp.eq.s32.totalorder %s17, 2
      %p145 = scmp.ne.s32.totalorder %s140, %s142
      %p146 = scmp.eq.s32.totalorder %s17, 0
      %p147 = por %p145, %p146
      %p148 = scmp.ne.s32.totalorder %s140, %s142
      %p149 = scmp.eq.s32.totalorder %s22, 2
      %p150 = por %p148, %p149
      %p151 = scmp.ne.s32.totalorder %s142, %s143
      %p152 = scmp.eq.s32.totalorder %s22, 0
      %p153 = por %p151, %p152
      %p154 = scmp.ne.s32.totalorder %s142, %s143
      %p155 = scmp.eq.s32.totalorder %s23, 2
      %p156 = por %p154, %p155
      %p158 = scmp.ne.s32.totalorder %s143, %s157
      %p159 = scmp.eq.s32.totalorder %s23, 0
      %p160 = por %p158, %p159
      %s162 = sadd.s32 %s161, 1
      %p165 = scmp.eq.s32.totalorder %s17, 2
      %p166 = scmp.ne.s32.totalorder %s161, %s163
      %p167 = scmp.eq.s32.totalorder %s17, 0
      %p168 = por %p166, %p167
      %p169 = scmp.ne.s32.totalorder %s161, %s163
      %p170 = scmp.eq.s32.totalorder %s22, 2
      %p171 = por %p169, %p170
      %p172 = scmp.ne.s32.totalorder %s163, %s164
      %p173 = scmp.eq.s32.totalorder %s22, 0
      %p174 = por %p172, %p173
      %p175 = scmp.ne.s32.totalorder %s163, %s164
      %p176 = scmp.eq.s32.totalorder %s23, 2
      %p177 = por %p175, %p176
      %p179 = scmp.ne.s32.totalorder %s164, %s178
      %p180 = scmp.eq.s32.totalorder %s23, 0
      %p181 = por %p179, %p180
      %s183 = sadd.s32 %s182, 1
      %p186 = scmp.eq.s32.totalorder %s17, 2
      %p187 = scmp.ne.s32.totalorder %s182, %s184
      %p188 = scmp.eq.s32.totalorder %s17, 0
      %p189 = por %p187, %p188
      %p190 = scmp.ne.s32.totalorder %s182, %s184
      %p191 = scmp.eq.s32.totalorder %s22, 2
      %p192 = por %p190, %p191
      %p193 = scmp.ne.s32.totalorder %s184, %s185
      %p194 = scmp.eq.s32.totalorder %s22, 0
      %p195 = por %p193, %p194
      %p196 = scmp.ne.s32.totalorder %s184, %s185
      %p197 = scmp.eq.s32.totalorder %s23, 2
      %p198 = por %p196, %p197
      %p200 = scmp.ne.s32.totalorder %s185, %s199
      %p201 = scmp.eq.s32.totalorder %s23, 0
      %p202 = por %p200, %p201
      %s203 = ssub.s32 %s17, %s24
      %p204 = scmp.eq.s32.totalorder %s203, 0
      %s206 = sadd.s32 %s205, 1
      %s207 = scalar_select %p204, %s205, %s206
      %p210 = pneg %p204
      %p211 = scmp.eq.s32.totalorder %s17, 2
      %p212 = por %p210, %p211
      %p213 = scmp.ne.s32.totalorder %s205, %s208
      %p214 = scmp.eq.s32.totalorder %s17, 0
      %p215 = por %p213, %p214
      %p216 = scmp.ne.s32.totalorder %s205, %s208
      %p217 = scmp.eq.s32.totalorder %s22, 2
      %p218 = por %p216, %p217
      %p219 = scmp.ne.s32.totalorder %s208, %s209
      %p220 = scmp.eq.s32.totalorder %s22, 0
      %p221 = por %p219, %p220
      %p222 = scmp.ne.s32.totalorder %s208, %s209
      %p223 = scmp.eq.s32.totalorder %s23, 2
      %p224 = por %p222, %p223
      %p226 = scmp.ne.s32.totalorder %s209, %s225
      %p227 = scmp.eq.s32.totalorder %s23, 0
      %p228 = por %p226, %p227
      %p229 = scmp.le.s32.totalorder 1, %s17
      %p230 = scmp.lt.s32.totalorder %s17, 4
      %p231 = pnand %p229, %p230
      %p232 = pneg %p231
      // Predicated region
      $region9: #{tpu_custom_call.1} parent=5 // pred_check
        _
      $region10: #{tpu_custom_call.1} parent=5 // pred_check_branch
        %234 = sbr.rel (%p231) target = $region12
      $region11: #{tpu_custom_call.1} parent=5 // pred_region
        %s235 = ssub.s32 %s17, 1
        // Predicated region
        $region13: #{tpu_custom_call.1} parent=11 // pred_check
          %p236 = pneg %p90
        $region14: #{tpu_custom_call.1} parent=11 // pred_check_branch
          %238 = sbr.rel (%p236) target = $region16
        $region15: #{tpu_custom_call.1} parent=11 // pred_region
          _
        $region16: #{tpu_custom_call.1} parent=11 // pred_fallthru
          _
        // Predicated region
        $region17: #{tpu_custom_call.1} parent=11 // pred_check
          %p239 = pneg %p111
        $region18: #{tpu_custom_call.1} parent=11 // pred_check_branch
          %241 = sbr.rel (%p239) target = $region20
        $region19: #{tpu_custom_call.1} parent=11 // pred_region
          _
        $region20: #{tpu_custom_call.1} parent=11 // pred_fallthru
          _
        // Predicated region
        $region21: #{tpu_custom_call.1} parent=11 // pred_check
          %p242 = pneg %p132
        $region22: #{tpu_custom_call.1} parent=11 // pred_check_branch
          %244 = sbr.rel (%p242) target = $region24
        $region23: #{tpu_custom_call.1} parent=11 // pred_region
          _
        $region24: #{tpu_custom_call.1} parent=11 // pred_fallthru
          _
        // Predicated region
        $region25: #{tpu_custom_call.1} parent=11 // pred_check
          %p245 = pneg %p153
        $region26: #{tpu_custom_call.1} parent=11 // pred_check_branch
          %247 = sbr.rel (%p245) target = $region28
        $region27: #{tpu_custom_call.1} parent=11 // pred_region
          _
        $region28: #{tpu_custom_call.1} parent=11 // pred_fallthru
          _
        // Predicated region
        $region29: #{tpu_custom_call.1} parent=11 // pred_check
          %p248 = pneg %p174
        $region30: #{tpu_custom_call.1} parent=11 // pred_check_branch
          %250 = sbr.rel (%p248) target = $region32
        $region31: #{tpu_custom_call.1} parent=11 // pred_region
          _
        $region32: #{tpu_custom_call.1} parent=11 // pred_fallthru
          _
        // Predicated region
        $region33: #{tpu_custom_call.1} parent=11 // pred_check
          %p251 = pneg %p195
        $region34: #{tpu_custom_call.1} parent=11 // pred_check_branch
          %253 = sbr.rel (%p251) target = $region36
        $region35: #{tpu_custom_call.1} parent=11 // pred_region
          _
        $region36: #{tpu_custom_call.1} parent=11 // pred_fallthru
          _
      $region12: #{tpu_custom_call.1} parent=5 // pred_fallthru
        _
      %p254 = scmp.lt.s32.totalorder %s17, 3
      // Predicated region
      $region37: #{tpu_custom_call.1} parent=5 // pred_check
        %p255 = pneg %p254
      $region38: #{tpu_custom_call.1} parent=5 // pred_check_branch
        %257 = sbr.rel (%p255) target = $region40
      $region39: #{tpu_custom_call.1} parent=5 // pred_region
        // Predicated region
        $region41: #{tpu_custom_call.1} parent=39 // pred_check
          %p258 = pneg %p37
        $region42: #{tpu_custom_call.1} parent=39 // pred_check_branch
          %260 = sbr.rel (%p258) target = $region44
        $region43: #{tpu_custom_call.1} parent=39 // pred_region
          %s261 = smul.u32 2, %s17
          %p262 = scmp.lt.s32.totalorder %s261, 5
          %s263 = scalar_select %p262, %s261, 5
          %s264 = smul.addr %s263, 8
          %s265 = scalar_lea.vmem %s0, %s264
          %s266 = smul.u32 2, %s17
        $region44: #{tpu_custom_call.1} parent=39 // pred_fallthru
          _
        // Predicated region
        $region45: #{tpu_custom_call.1} parent=39 // pred_check
          %p267 = pneg %p63
        $region46: #{tpu_custom_call.1} parent=39 // pred_check_branch
          %269 = sbr.rel (%p267) target = $region48
        $region47: #{tpu_custom_call.1} parent=39 // pred_region
          %s270 = smul.u32 2, %s17
          %p271 = scmp.lt.s32.totalorder %s270, 5
          %s272 = scalar_select %p271, %s270, 5
          %s273 = smul.addr %s272, 8
          %s274 = scalar_lea.vmem %s1, %s273
          %s275 = smul.u32 2, %s17
        $region48: #{tpu_custom_call.1} parent=39 // pred_fallthru
          _
      $region40: #{tpu_custom_call.1} parent=5 // pred_fallthru
        _
      %p276 = scmp.le.s32.totalorder 1, %s17
      %p277 = scmp.lt.s32.totalorder %s17, 4
      %p278 = pnand %p276, %p277
      %p279 = pneg %p278
      // Predicated region
      $region49: #{tpu_custom_call.1} parent=5 // pred_check
        _
      $region50: #{tpu_custom_call.1} parent=5 // pred_check_branch
        %281 = sbr.rel (%p278) target = $region52
      $region51: #{tpu_custom_call.1} parent=5 // pred_region
        %s282 = ssub.s32 %s17, 1
        %s283 = smul.u32 2, %s22
        %p284 = scmp.lt.s32.totalorder %s283, 5
        %s285 = scalar_select %p284, %s283, 5
        %s286 = smul.addr %s285, 8
        %s287 = scalar_lea.vmem %s0, %s286
        %p288 = pneg %p43
        %p289 = pneg %p40
        %s290 = smul.u32 2, %s22
        %p291 = scmp.lt.s32.totalorder %s290, 5
        %s292 = scalar_select %p291, %s290, 5
        %s293 = smul.addr %s292, 8
        %s294 = scalar_lea.vmem %s1, %s293
        %p295 = pneg %p69
        %p296 = pneg %p66
        %p297 = pneg %p90
        %p298 = pneg %p87
        %p299 = pneg %p111
        %p300 = pneg %p108
        %p301 = pneg %p132
        %p302 = pneg %p129
        %p303 = pneg %p153
        %p304 = pneg %p150
        %p305 = pneg %p174
        %p306 = pneg %p171
        %p307 = pneg %p195
        %p308 = pneg %p192
        %p309 = pneg %p221
        %p310 = pneg %p218
        %s311 = sand.u32 %s208, 1
        %s312 = scalar_lea.sflag [#allocation3], %s311
        %s313 = sand.u32 %s208, 1
        %s314 = smul.addr %s313, 16
        %s315 = scalar_lea.vmem [#allocation2], %s314
        %s316 = smul.u32 2, %s22
        %p317 = scmp.lt.s32.totalorder %s316, 5
        %s318 = scalar_select %p317, %s316, 5
        %s319 = smul.addr %s318, 8
        %s320 = scalar_lea.vmem %s0, %s319
        %s321 = smul.u32 2, %s22
        %s322 = smul.u32 2, %s22
        %p323 = scmp.lt.s32.totalorder %s322, 5
        %s324 = scalar_select %p323, %s322, 5
        %s325 = smul.addr %s324, 8
        %s326 = scalar_lea.vmem %s1, %s325
        %s327 = smul.u32 2, %s22
        %s328 = smul.u32 2, %s22
        %v329 = vld [vmem:[%s326] sm:$0xff]
        %v330 = vld [vmem:[%s326 + $0x8] sm:$0xff]
        %v331 = vxor.u32 %v329, 2147483648
        %v332 = vxor.u32 %v330, 2147483648
        %v333 = vmul.f32 %v331, 1.442695
        %v334 = vpow.pop %v333
        %v335 = vmul.f32 %v332, 1.442695
        %v336 = vpow.pop %v335
        %v337 = vadd.f32 %v334, 1.0
        %v338 = vadd.f32 %v336, 1.0
        %v339 = vrcp.pop %v337
        %v340 = vmul.f32 1.0, %v339
        %v341 = vrcp.pop %v338
        %v342 = vmul.f32 1.0, %v341
        %v343 = vmul.f32 %v329, %v340
        %v344 = vmul.f32 %v330, %v342
        %v345 = vld [vmem:[%s2] sm:$0xff]
        %v346 = vld [vmem:[%s2 + $0x8] sm:$0xff]
        %v347 = vld [vmem:[%s2 + $0x10] sm:$0xff]
        %v348 = vld [vmem:[%s2 + $0x18] sm:$0xff]
        %v349 = vld [vmem:[%s3] sm:$0x1]
        %v351 = vlaneseq
        %v352 = vshrl.u32 %v351, 7
        %v353 = vsub.s32 0, %v352
        %v354 = vrot.slane %v349, %v353
        %vm356 = vcmask 261120
        %v358 = vsel %vm356, %v343, 0
        %v361 = vsel %vm356, %v344, 0
        %363 = vmatprep.subr.mxu0 0.0
        %364 = vmatpush1.msra.mxu0 0.0
        %365 = vmatprep.subr.mxu0 0.0
        %366 = vmatpush1.msra.mxu0 0.0
        %367 = vmatprep.subr.mxu0 0.0
        %368 = vmatpush1.msra.mxu0 0.0
        %369 = vmatprep.subr.mxu0 0.0
        %370 = vmatpush1.msra.mxu0 0.0
        %371 = vmatprep.subr.mxu0 0.0
        %372 = vmatpush1.msra.mxu0 0.0
        %373 = vmatprep.subr.mxu0 0.0
        %374 = vmatpush1.msra.mxu0 0.0
        %375 = vmatprep.subr.mxu0 0.0
        %376 = vmatpush1.msra.mxu0 0.0
        %377 = vmatprep.subr.mxu0 0.0
        %378 = vmatpush1.msra.mxu0 0.0
        %379 = vmatprep.subr.mxu0 0.0
        %380 = vmatpush1.msra.mxu0 0.0
        %381 = vmatprep.subr.mxu0 0.0
        %382 = vmatpush1.msra.mxu0 0.0
        %383 = vmatprep.subr.mxu0 0.0
        %384 = vmatpush1.msra.mxu0 0.0
        %385 = vmatprep.subr.mxu0 0.0
        %386 = vmatpush1.msra.mxu0 0.0
        %387 = vmatprep.subr.mxu0 0.0
        %388 = vmatpush1.msra.mxu0 %v348
        %389 = vmatprep.subr.mxu0 0.0
        %390 = vmatpush1.msra.mxu0 %v347
        %391 = vmatprep.subr.mxu0 0.0
        %392 = vmatpush1.msra.mxu0 %v346
        %393 = vmatprep.subr.mxu0 0.0
        %394 = vmatpush1.msra.mxu0 %v345
        %395 = vmatprep.subr.mxu0 0.0
        %396 = vmatpush2.msra.mxu0 0.0
        %397 = vmatprep.subr.mxu0 0.0
        %398 = vmatpush2.msra.mxu0 0.0
        %399 = vmatprep.subr.mxu0 0.0
        %400 = vmatpush2.msra.mxu0 0.0
        %401 = vmatprep.subr.mxu0 0.0
        %402 = vmatpush2.msra.mxu0 0.0
        %403 = vmatprep.subr.mxu0 0.0
        %404 = vmatpush2.msra.mxu0 0.0
        %405 = vmatprep.subr.mxu0 0.0
        %406 = vmatpush2.msra.mxu0 0.0
        %407 = vmatprep.subr.mxu0 0.0
        %408 = vmatpush2.msra.mxu0 0.0
        %409 = vmatprep.subr.mxu0 0.0
        %410 = vmatpush2.msra.mxu0 0.0
        %411 = vmatprep.subr.mxu0 0.0
        %412 = vmatpush2.msra.mxu0 0.0
        %413 = vmatprep.subr.mxu0 0.0
        %414 = vmatpush2.msra.mxu0 0.0
        %415 = vmatprep.subr.mxu0 0.0
        %416 = vmatpush2.msra.mxu0 0.0
        %417 = vmatprep.subr.mxu0 0.0
        %418 = vmatpush2.msra.mxu0 0.0
        %419 = vmatprep.subr.mxu0 0.0
        %420 = vmatpush2.msra.mxu0 0.0
        %421 = vmatprep.subr.mxu0 0.0
        %422 = vmatpush2.msra.mxu0 0.0
        %423 = vmatprep.subr.mxu0 0.0
        %424 = vmatpush2.msra.mxu0 0.0
        %425 = vmatprep.subr.mxu0 0.0
        %426 = vmatpush2.msra.mxu0 0.0
        %427 = vmatprep.mubr.f32.mxu0 0.0
        %428 = vmatmul.mubr.f32.gmra.mxu0 %v358
        %v429 = vpop.f32.mrf.mxu0
        %v430 = vadd.f32 %v354, %v429
        %v431 = vpop.f32.mrf.mxu0
        %432 = vmatprep.mubr.f32.mxu0 0.0
        %433 = vmatmul.mubr.f32.gmra.mxu0 %v361
        %v434 = vpop.f32.mrf.mxu0
        %v435 = vadd.f32 %v354, %v434
        %v436 = vpop.f32.mrf.mxu0
        %437 = vdwg.mxu0
        %v438 = vld [vmem:[%s4] sm:$0xff]
        %v439 = vld [vmem:[%s4 + $0x8] sm:$0xff]
        %v440 = vld [vmem:[%s4 + $0x10] sm:$0xff]
        %v441 = vld [vmem:[%s4 + $0x18] sm:$0xff]
        %v442 = vld [vmem:[%s5] sm:$0x1]
        %v444 = vlaneseq
        %v445 = vshrl.u32 %v444, 7
        %v446 = vsub.s32 0, %v445
        %v447 = vrot.slane %v442, %v446
        %449 = vmatprep.subr.mxu0 0.0
        %450 = vmatpush1.msra.mxu0 0.0
        %451 = vmatprep.subr.mxu0 0.0
        %452 = vmatpush1.msra.mxu0 0.0
        %453 = vmatprep.subr.mxu0 0.0
        %454 = vmatpush1.msra.mxu0 0.0
        %455 = vmatprep.subr.mxu0 0.0
        %456 = vmatpush1.msra.mxu0 0.0
        %457 = vmatprep.subr.mxu0 0.0
        %458 = vmatpush1.msra.mxu0 0.0
        %459 = vmatprep.subr.mxu0 0.0
        %460 = vmatpush1.msra.mxu0 0.0
        %461 = vmatprep.subr.mxu0 0.0
        %462 = vmatpush1.msra.mxu0 0.0
        %463 = vmatprep.subr.mxu0 0.0
        %464 = vmatpush1.msra.mxu0 0.0
        %465 = vmatprep.subr.mxu0 0.0
        %466 = vmatpush1.msra.mxu0 0.0
        %467 = vmatprep.subr.mxu0 0.0
        %468 = vmatpush1.msra.mxu0 0.0
        %469 = vmatprep.subr.mxu0 0.0
        %470 = vmatpush1.msra.mxu0 0.0
        %471 = vmatprep.subr.mxu0 0.0
        %472 = vmatpush1.msra.mxu0 0.0
        %473 = vmatprep.subr.mxu0 0.0
        %474 = vmatpush1.msra.mxu0 %v441
        %475 = vmatprep.subr.mxu0 0.0
        %476 = vmatpush1.msra.mxu0 %v440
        %477 = vmatprep.subr.mxu0 0.0
        %478 = vmatpush1.msra.mxu0 %v439
        %479 = vmatprep.subr.mxu0 0.0
        %480 = vmatpush1.msra.mxu0 %v438
        %481 = vmatprep.subr.mxu0 0.0
        %482 = vmatpush2.msra.mxu0 0.0
        %483 = vmatprep.subr.mxu0 0.0
        %484 = vmatpush2.msra.mxu0 0.0
        %485 = vmatprep.subr.mxu0 0.0
        %486 = vmatpush2.msra.mxu0 0.0
        %487 = vmatprep.subr.mxu0 0.0
        %488 = vmatpush2.msra.mxu0 0.0
        %489 = vmatprep.subr.mxu0 0.0
        %490 = vmatpush2.msra.mxu0 0.0
        %491 = vmatprep.subr.mxu0 0.0
        %492 = vmatpush2.msra.mxu0 0.0
        %493 = vmatprep.subr.mxu0 0.0
        %494 = vmatpush2.msra.mxu0 0.0
        %495 = vmatprep.subr.mxu0 0.0
        %496 = vmatpush2.msra.mxu0 0.0
        %497 = vmatprep.subr.mxu0 0.0
        %498 = vmatpush2.msra.mxu0 0.0
        %499 = vmatprep.subr.mxu0 0.0
        %500 = vmatpush2.msra.mxu0 0.0
        %501 = vmatprep.subr.mxu0 0.0
        %502 = vmatpush2.msra.mxu0 0.0
        %503 = vmatprep.subr.mxu0 0.0
        %504 = vmatpush2.msra.mxu0 0.0
        %505 = vmatprep.subr.mxu0 0.0
        %506 = vmatpush2.msra.mxu0 0.0
        %507 = vmatprep.subr.mxu0 0.0
        %508 = vmatpush2.msra.mxu0 0.0
        %509 = vmatprep.subr.mxu0 0.0
        %510 = vmatpush2.msra.mxu0 0.0
        %511 = vmatprep.subr.mxu0 0.0
        %512 = vmatpush2.msra.mxu0 0.0
        %513 = vmatprep.mubr.f32.mxu0 0.0
        %514 = vmatmul.mubr.f32.gmra.mxu0 %v358
        %v515 = vpop.f32.mrf.mxu0
        %v516 = vadd.f32 %v447, %v515
        %v517 = vpop.f32.mrf.mxu0
        %518 = vmatprep.mubr.f32.mxu0 0.0
        %519 = vmatmul.mubr.f32.gmra.mxu0 %v361
        %v520 = vpop.f32.mrf.mxu0
        %v521 = vadd.f32 %v447, %v520
        %v522 = vpop.f32.mrf.mxu0
        %523 = vdwg.mxu0
        %v524 = vld [vmem:[%s320] sm:$0xff]
        %v525 = vld [vmem:[%s320 + $0x8] sm:$0xff]
        %v526 = vsel %vm356, %v524, 0.0
        %527 = vadd.xlane.f32.xlu0 %v526
        %v528 = vpop.xlane.xlu0 %527
        %v529 = vsel %vm356, %v525, 0.0
        %530 = vadd.xlane.f32.xlu0 %v529
        %v531 = vpop.xlane.xlu0 %530
        %v532 = vrcp.pop 32.0
        %v533 = vmul.f32 %v528, %v532
        %v534 = vmul.f32 %v531, %v532
        %v535 = vsub.f32 %v524, %v533
        %v536 = vsub.f32 %v525, %v534
        %v537 = vmul.f32 %v535, %v535
        %v538 = vmul.f32 %v536, %v536
        %v539 = vsel %vm356, %v537, 0.0
        %540 = vadd.xlane.f32.xlu0 %v539
        %v541 = vpop.xlane.xlu0 %540
        %v542 = vsel %vm356, %v538, 0.0
        %543 = vadd.xlane.f32.xlu0 %v542
        %v544 = vpop.xlane.xlu0 %543
        %v545 = vmul.f32 %v541, %v532
        %v546 = vmul.f32 %v544, %v532
        %v547 = vadd.f32 %v545, 0.0001
        %v548 = vadd.f32 %v546, 0.0001
        %v549 = vrsqrt.pop %v547
        %v550 = vrsqrt.pop %v548
        %v551 = vmul.f32 %v535, %v549
        %v552 = vmul.f32 %v536, %v550
        %v553 = vmul.f32 %v551, %v516
        %v554 = vmul.f32 %v552, %v521
        %v555 = vadd.f32 %v553, %v430
        %v556 = vadd.f32 %v554, %v435
        %v557 = vld [vmem:[%s6] sm:$0xff]
        %v558 = vld [vmem:[%s6 + $0x8] sm:$0xff]
        %v559 = vld [vmem:[%s6 + $0x10] sm:$0xff]
        %v560 = vld [vmem:[%s6 + $0x18] sm:$0xff]
        %v561 = vld [vmem:[%s7] sm:$0x1]
        %v563 = vlaneseq
        %v564 = vshrl.u32 %v563, 7
        %v565 = vsub.s32 0, %v564
        %v566 = vrot.slane %v561, %v565
        %v569 = vsel %vm356, %v555, 0
        %v572 = vsel %vm356, %v556, 0
        %574 = vmatprep.subr.mxu0 0.0
        %575 = vmatpush1.msra.mxu0 0.0
        %576 = vmatprep.subr.mxu0 0.0
        %577 = vmatpush1.msra.mxu0 0.0
        %578 = vmatprep.subr.mxu0 0.0
        %579 = vmatpush1.msra.mxu0 0.0
        %580 = vmatprep.subr.mxu0 0.0
        %581 = vmatpush1.msra.mxu0 0.0
        %582 = vmatprep.subr.mxu0 0.0
        %583 = vmatpush1.msra.mxu0 0.0
        %584 = vmatprep.subr.mxu0 0.0
        %585 = vmatpush1.msra.mxu0 0.0
        %586 = vmatprep.subr.mxu0 0.0
        %587 = vmatpush1.msra.mxu0 0.0
        %588 = vmatprep.subr.mxu0 0.0
        %589 = vmatpush1.msra.mxu0 0.0
        %590 = vmatprep.subr.mxu0 0.0
        %591 = vmatpush1.msra.mxu0 0.0
        %592 = vmatprep.subr.mxu0 0.0
        %593 = vmatpush1.msra.mxu0 0.0
        %594 = vmatprep.subr.mxu0 0.0
        %595 = vmatpush1.msra.mxu0 0.0
        %596 = vmatprep.subr.mxu0 0.0
        %597 = vmatpush1.msra.mxu0 0.0
        %598 = vmatprep.subr.mxu0 0.0
        %599 = vmatpush1.msra.mxu0 %v560
        %600 = vmatprep.subr.mxu0 0.0
        %601 = vmatpush1.msra.mxu0 %v559
        %602 = vmatprep.subr.mxu0 0.0
        %603 = vmatpush1.msra.mxu0 %v558
        %604 = vmatprep.subr.mxu0 0.0
        %605 = vmatpush1.msra.mxu0 %v557
        %606 = vmatprep.subr.mxu0 0.0
        %607 = vmatpush2.msra.mxu0 0.0
        %608 = vmatprep.subr.mxu0 0.0
        %609 = vmatpush2.msra.mxu0 0.0
        %610 = vmatprep.subr.mxu0 0.0
        %611 = vmatpush2.msra.mxu0 0.0
        %612 = vmatprep.subr.mxu0 0.0
        %613 = vmatpush2.msra.mxu0 0.0
        %614 = vmatprep.subr.mxu0 0.0
        %615 = vmatpush2.msra.mxu0 0.0
        %616 = vmatprep.subr.mxu0 0.0
        %617 = vmatpush2.msra.mxu0 0.0
        %618 = vmatprep.subr.mxu0 0.0
        %619 = vmatpush2.msra.mxu0 0.0
        %620 = vmatprep.subr.mxu0 0.0
        %621 = vmatpush2.msra.mxu0 0.0
        %622 = vmatprep.subr.mxu0 0.0
        %623 = vmatpush2.msra.mxu0 0.0
        %624 = vmatprep.subr.mxu0 0.0
        %625 = vmatpush2.msra.mxu0 0.0
        %626 = vmatprep.subr.mxu0 0.0
        %627 = vmatpush2.msra.mxu0 0.0
        %628 = vmatprep.subr.mxu0 0.0
        %629 = vmatpush2.msra.mxu0 0.0
        %630 = vmatprep.subr.mxu0 0.0
        %631 = vmatpush2.msra.mxu0 0.0
        %632 = vmatprep.subr.mxu0 0.0
        %633 = vmatpush2.msra.mxu0 0.0
        %634 = vmatprep.subr.mxu0 0.0
        %635 = vmatpush2.msra.mxu0 0.0
        %636 = vmatprep.subr.mxu0 0.0
        %637 = vmatpush2.msra.mxu0 0.0
        %638 = vmatprep.mubr.f32.mxu0 0.0
        %639 = vmatmul.mubr.f32.gmra.mxu0 %v569
        %v640 = vpop.f32.mrf.mxu0
        %v641 = vadd.f32 %v566, %v640
        %v642 = vpop.f32.mrf.mxu0
        %643 = vmatprep.mubr.f32.mxu0 0.0
        %644 = vmatmul.mubr.f32.gmra.mxu0 %v572
        %v645 = vpop.f32.mrf.mxu0
        %v646 = vadd.f32 %v566, %v645
        %v647 = vpop.f32.mrf.mxu0
        %648 = vdwg.mxu0
        %649 = vst [vmem:[%s315] sm:$0xff] %v641
        %650 = vst [vmem:[%s315 + $0x8] sm:$0xff] %v646
        %s651 = sand.u32 %s208, 1
        %s652 = scalar_lea.sflag [#allocation3], %s651
        %s653 = sand.u32 %s208, 1
        %s654 = smul.addr %s653, 16
        %s655 = scalar_lea.vmem [#allocation2], %s654
        // Predicated region
        $region53: #{tpu_custom_call.1} parent=51 // pred_check
          %p656 = pneg %p218
        $region54: #{tpu_custom_call.1} parent=51 // pred_check_branch
          %658 = sbr.rel (%p656) target = $region56
        $region55: #{tpu_custom_call.1} parent=51 // pred_region
          %s659 = smul.u32 2, %s22
          %s661 = ssub.s32 256, 256
          %662 = vsyncadd %s652, %s661
          %s663 = smul.addr %s659, 128
          %s664 = scalar_lea.hbm %s8, %s663
          %s665 = sshll.u32 %s655, 4
          %s666 = int_to_ptr.vmem [resolvable:$true] %s665
          %671 = dma.vmem_to_hbm [thread:$0]  %s666, 256, %s664, %s652, 128, 128, 8
        $region56: #{tpu_custom_call.1} parent=51 // pred_fallthru
          _
      $region52: #{tpu_custom_call.1} parent=5 // pred_fallthru
        _
      %p672 = scmp.le.s32.totalorder 2, %s17
      // Predicated region
      $region57: #{tpu_custom_call.1} parent=5 // pred_check
        %p673 = pneg %p672
      $region58: #{tpu_custom_call.1} parent=5 // pred_check_branch
        %675 = sbr.rel (%p673) target = $region60
      $region59: #{tpu_custom_call.1} parent=5 // pred_region
        %s676 = ssub.s32 %s17, 2
        // Predicated region
        $region61: #{tpu_custom_call.1} parent=59 // pred_check
          %p677 = pneg %p224
        $region62: #{tpu_custom_call.1} parent=59 // pred_check_branch
          %679 = sbr.rel (%p677) target = $region64
        $region63: #{tpu_custom_call.1} parent=59 // pred_region
          %s680 = sand.u32 %s209, 1
          %s681 = scalar_lea.sflag [#allocation3], %s680
          %s682 = sand.u32 %s209, 1
          %s683 = smul.addr %s682, 16
          %s684 = scalar_lea.vmem [#allocation2], %s683
          %685 = dma.done %s681, 256
        $region64: #{tpu_custom_call.1} parent=59 // pred_fallthru
          _
      $region60: #{tpu_custom_call.1} parent=5 // pred_fallthru
        _
    $region6: #{tpu_custom_call.1} parent=1 // loop_footer
      %s21 = sadd.s32 1, %s17
    $region7: #{tpu_custom_call.1} parent=1 // loop_footer_branch
      %16 = sbr.rel target = $region3
    $region8: #{tpu_custom_call.1} parent=1 // loop_exit
      _
    %686 = vsyncpa [#allocation3], 1
    %s687 = scalar_lea.sflag [#allocation3], 1
    %688 = vsyncpa %s687, 1

</llo_original>
